<compile_context>
chip_gen: v5e
topology: v5e:2x2
jax: 0.10.0
libtpu: 0.0.40
codegen_flags: <defaults>
</compile_context>

<pallas_src>
import functools

import jax
import jax.numpy as jnp
from jax.experimental import pallas as pl
from jax.experimental.pallas import tpu as pltpu

_LANES = 128


def _linear_classifier_kernel(x_ref, w_ref, b_ref, o_ref):
    # x_ref: (TM, dim) VMEM (streamed)   w_ref: (dim, 1) VMEM (resident)
    # b_ref: (1, 1)   SMEM scalar        o_ref: (TM, 1) VMEM
    acc = jnp.dot(x_ref[...], w_ref[...], preferred_element_type=jnp.float32)  # MXU
    o_ref[...] = (acc + b_ref[0, 0]).astype(o_ref.dtype)


@functools.partial(jax.jit, static_argnames=("block_rows",))
def linear_classifier_forward(x, w, b, *, block_rows=None):
    """x: (N, dim) f32, w: (dim, 1) f32, b: (1,) f32  ->  (N,) f32."""
    n, dim = x.shape
    x = x.astype(jnp.float32)
    w_col = w.reshape(dim, 1).astype(jnp.float32)    # resident weights (MXU RHS)
    b2d = b.reshape(1, 1).astype(jnp.float32)        # SMEM scalar

    # --- row-tile (TM) selection ---------------------------------------------
    # VMEM cost of the double-buffered streamed x tile: last dim is laid out on
    # 128 lanes, so bytes ~= 2 * TM * round_up(dim, 128) * 4.  Keep that <=32 MiB
    # under a 48 MiB scoped limit (v7x has 64 MiB physical VMEM).
    dim_lanes = ((dim + _LANES - 1) // _LANES) * _LANES
    x_budget_bytes = 32 * 1024 * 1024
    tm_budget = max(_LANES, (x_budget_bytes // (2 * dim_lanes * 4)) // _LANES * _LANES)

    if block_rows is None:
        # Keep >=4 grid steps when N allows it so the "parallel" axis splits
        # across both v7x TensorCores (moot on single-core v5e/v6e).
        tm_split = max(_LANES, ((pl.cdiv(n, 4) + _LANES - 1) // _LANES) * _LANES)
        tm = min(tm_budget, tm_split)
    else:
        tm = min(tm_budget, max(_LANES, (block_rows // _LANES) * _LANES))

    # Ragged last block instead of padding x: tail rows (>= n) are undefined in
    # the kernel and their stores are dropped; nothing extra touches HBM.
    grid = (pl.cdiv(n, tm),)

    out = pl.pallas_call(
        _linear_classifier_kernel,
        grid=grid,
        in_specs=[
            pl.BlockSpec((tm, dim), lambda i: (i, 0)),          # streamed x tiles
            pl.BlockSpec((dim, 1), lambda i: (0, 0)),           # resident w column
            pl.BlockSpec(memory_space=pltpu.MemorySpace.SMEM),  # scalar bias
        ],
        out_specs=pl.BlockSpec((tm, 1), lambda i: (i, 0)),
        out_shape=jax.ShapeDtypeStruct((n, 1), jnp.float32),
        compiler_params=pltpu.CompilerParams(
            dimension_semantics=("parallel",),      # megacore sharding on v7x
            vmem_limit_bytes=48 * 1024 * 1024,      # safe on v5e/v6e/v7x
        ),
    )(x, w_col, b2d)
    return out[:, 0]


if __name__ == "__main__":
    key = jax.random.PRNGKey(0)
    kx, kw, kb = jax.random.split(key, 3)

    # Small shapes consistent with the module's forward; N deliberately not a
    # multiple of the row tile so the ragged-tail path is exercised
    # (auto TM -> 128, grid of 3 steps, last block partially out of bounds).
    N, DIM = 300, 32
    x = jax.random.normal(kx, (N, DIM), dtype=jnp.float32)
    # mirrors torch.randn(dim, 1), torch.randn(1)
    w = jax.random.normal(kw, (DIM, 1), dtype=jnp.float32)
    b = jax.random.normal(kb, (1,), dtype=jnp.float32)

    out = linear_classifier_forward(x, w, b)
    out = jax.block_until_ready(out)

    # reference check in plain JAX (matches the PyTorch forward semantics)
    ref = x @ w.reshape(DIM) + b
    assert out.shape == (N,)
    assert jnp.allclose(out, ref, atol=1e-3, rtol=1e-5), float(jnp.max(jnp.abs(out - ref)))

    print("KERNEL_OK")
</pallas_src>

<mosaic_0001>
module attributes {stable_mosaic.version = 11 : i64} {
  func.func @_linear_classifier_kernel(%arg0: i32, %arg1: memref<128x32xf32, #tpu.memory_space<vmem>>, %arg2: memref<32x1xf32, #tpu.memory_space<vmem>>, %arg3: memref<1x1xf32, #tpu.memory_space<smem>>, %arg4: memref<128x1xf32, #tpu.memory_space<vmem>>) attributes {dimension_semantics = [#tpu.dimension_semantics<parallel>], iteration_bounds = array<i64: 3>, scalar_prefetch = 0 : i64, scratch_operands = 0 : i64, tpu.core_type = #tpu.core_type<tc>, window_params = [{transform_indices = @transform_0, window_bounds = array<i64: 128, 32>}, {pipeline_mode = #tpu.pipeline_mode<synchronous>, transform_indices = @transform_1, window_bounds = array<i64: 32, 1>}, {transform_indices = @transform_2, window_bounds = array<i64: 1, 1>}, {transform_indices = @transform_3, window_bounds = array<i64: 128, 1>}]} {
    %c0 = arith.constant 0 : index
    %c0_0 = arith.constant 0 : index
    %0 = vector.load %arg1[%c0, %c0_0] : memref<128x32xf32, #tpu.memory_space<vmem>>, vector<128x32xf32>
    %c0_1 = arith.constant 0 : index
    %c0_2 = arith.constant 0 : index
    %1 = vector.load %arg2[%c0_1, %c0_2] : memref<32x1xf32, #tpu.memory_space<vmem>>, vector<32x1xf32>
    %cst = arith.constant dense<0.000000e+00> : vector<128x1xf32>
    %2 = tpu.matmul %0, %1, %cst {dimension_numbers = #tpu.dot_dimension_numbers<[1], [0], [0], [1], [0, 0, 1, 1], [], []>} : vector<128x32xf32>, vector<32x1xf32>, vector<128x1xf32> -> vector<128x1xf32>
    %c0_3 = arith.constant 0 : index
    %c0_4 = arith.constant 0 : index
    %3 = memref.load %arg3[%c0_3, %c0_4] : memref<1x1xf32, #tpu.memory_space<smem>>
    %4 = vector.broadcast %3 : f32 to vector<128x1xf32>
    %5 = arith.addf %2, %4 : vector<128x1xf32>
    %c0_5 = arith.constant 0 : index
    %c0_6 = arith.constant 0 : index
    %6 = vector.load %arg4[%c0_5, %c0_6] : memref<128x1xf32, #tpu.memory_space<vmem>>, vector<128x1xf32>
    tpu.vector_store %arg4[%c0_5, %c0_6], %5 {strides = array<i32>} : memref<128x1xf32, #tpu.memory_space<vmem>>, vector<128x1xf32>,
    return
  }
  func.func @transform_0(%arg0: i32) -> (i32, i32) {
    %c0_i32 = arith.constant 0 : i32
    %c0_i32_0 = arith.constant 0 : i32
    return %arg0, %c0_i32 : i32, i32
  }
  func.func @transform_1(%arg0: i32) -> (i32, i32) {
    %c0_i32 = arith.constant 0 : i32
    %c0_i32_0 = arith.constant 0 : i32
    %c0_i32_1 = arith.constant 0 : i32
    return %c0_i32, %c0_i32_0 : i32, i32
  }
  func.func @transform_2(%arg0: i32) -> (i32, i32) {
    %c0_i32 = arith.constant 0 : i32
    %c0_i32_0 = arith.constant 0 : i32
    %c0_i32_1 = arith.constant 0 : i32
    return %c0_i32, %c0_i32_0 : i32, i32
  }
  func.func @transform_3(%arg0: i32) -> (i32, i32) {
    %c0_i32 = arith.constant 0 : i32
    %c0_i32_0 = arith.constant 0 : i32
    return %arg0, %c0_i32 : i32, i32
  }
}

</mosaic_0001>

<llo_original>
// kernel: linear_classifier_forward.1
$region0: #{linear_classifier_forward.1}
  #allocation0 [shape = 'u32[]', space=smem, size = 0x4, offset = 0x4, fixed_abs, tag = 'smem constant byte address 0x4 - core index']
  #allocation1 [shape = 'u32[72,128]{1,0:T(1,128)}', space=vmem, size = 0x9000, scoped, tag = 'internal scratch']
  #allocation2 [shape = 'f32[1,1]{1,0:T(1,128)S(6)}', space=smem, size = 0x200, scoped, tag = 'scoped memory for linear_classifier_forward.1']
  %s0 = inlined_call_operand.vmem [shape: f32[300,32], index: 0, kind: input, shape index: {}]
  %s1 = inlined_call_operand.vmem [shape: f32[32,1], index: 1, kind: input, shape index: {}]
  %s2 = inlined_call_operand.<no memory space> [shape: f32[1,1], index: 2, kind: input, shape index: {}]
  %s3 = inlined_call_operand.vmem [shape: f32[300,1], index: 3, kind: output, shape index: {}]
  %s4 = sld [smem:[#allocation0]]
  $region93: #{linear_classifier_forward.1} parent=0
    _
  %s6 = ssub.s32 1, %s4
  %s7 = scalar_select 0, %s6, %s4
  %8 = sst [smem:[#allocation2]] %s2
  $region1: #{linear_classifier_forward.1} parent=0
    #allocation3 [shape = 'u8[131072]{0}', space=vmem, size = 0x20000, scoped, tag = 'output window, operand 0']
    loop: start=0, step=1, limit=5
    $region2: #{linear_classifier_forward.1} parent=1 // loop_pre_header
      _
    $region3: #{linear_classifier_forward.1} parent=1 // loop_header
      %s10 = sphi 0, %s14
      %p11 = scmp.ge.s32.totalorder %s10, 5
      %s20 = sphi 0, %s22
      %s23 = sphi 0, %s20
      %s24 = sphi 0, %s23
      %s40 = sphi 0, %s24
      %s44 = sphi 0, %s44
      %s46 = sphi 0, %s44
      %s47 = sphi 0, %s46
      %s61 = sphi 0, %s47
      %s65 = sphi 0, %s65
      %s67 = sphi 0, %s65
      %s68 = sphi 0, %s67
      %s82 = sphi 0, %s68
      %s88 = sphi 0, %s90
      %s91 = sphi 0, %s88
      %s92 = sphi 0, %s91
      %s108 = sphi 0, %s92
    $region4: #{linear_classifier_forward.1} parent=1 // loop_header_branch
      %13 = sbr.rel (%p11) target = $region8
    $region5: #{linear_classifier_forward.1} parent=1 // loop_body
      %s15 = ssub.s32 %s10, 1
      %s16 = ssub.s32 %s10, 2
      %s17 = sadd.s32 %s10, 1
      %s18 = ssub.s32 %s10, %s17
      %p19 = scmp.eq.s32.totalorder %s18, 0
      %s21 = sadd.s32 %s20, 1
      %s22 = scalar_select %p19, %s20, %s21
      %p25 = pneg %p19
      %p26 = scmp.eq.s32.totalorder %s10, 2
      %p27 = por %p25, %p26
      %p28 = scmp.ne.s32.totalorder %s20, %s23
      %p29 = scmp.eq.s32.totalorder %s10, 0
      %p30 = por %p28, %p29
      %p31 = scmp.ne.s32.totalorder %s20, %s23
      %p32 = scmp.eq.s32.totalorder %s15, 2
      %p33 = por %p31, %p32
      %p34 = scmp.ne.s32.totalorder %s23, %s24
      %p35 = scmp.eq.s32.totalorder %s15, 0
      %p36 = por %p34, %p35
      %p37 = scmp.ne.s32.totalorder %s23, %s24
      %p38 = scmp.eq.s32.totalorder %s16, 2
      %p39 = por %p37, %p38
      %p41 = scmp.ne.s32.totalorder %s24, %s40
      %p42 = scmp.eq.s32.totalorder %s16, 0
      %p43 = por %p41, %p42
      %s45 = sadd.s32 %s44, 1
      %p48 = scmp.eq.s32.totalorder %s10, 2
      %p49 = scmp.ne.s32.totalorder %s44, %s46
      %p50 = scmp.eq.s32.totalorder %s10, 0
      %p51 = por %p49, %p50
      %p52 = scmp.ne.s32.totalorder %s44, %s46
      %p53 = scmp.eq.s32.totalorder %s15, 2
      %p54 = por %p52, %p53
      %p55 = scmp.ne.s32.totalorder %s46, %s47
      %p56 = scmp.eq.s32.totalorder %s15, 0
      %p57 = por %p55, %p56
      %p58 = scmp.ne.s32.totalorder %s46, %s47
      %p59 = scmp.eq.s32.totalorder %s16, 2
      %p60 = por %p58, %p59
      %p62 = scmp.ne.s32.totalorder %s47, %s61
      %p63 = scmp.eq.s32.totalorder %s16, 0
      %p64 = por %p62, %p63
      %s66 = sadd.s32 %s65, 1
      %p69 = scmp.eq.s32.totalorder %s10, 2
      %p70 = scmp.ne.s32.totalorder %s65, %s67
      %p71 = scmp.eq.s32.totalorder %s10, 0
      %p72 = por %p70, %p71
      %p73 = scmp.ne.s32.totalorder %s65, %s67
      %p74 = scmp.eq.s32.totalorder %s15, 2
      %p75 = por %p73, %p74
      %p76 = scmp.ne.s32.totalorder %s67, %s68
      %p77 = scmp.eq.s32.totalorder %s15, 0
      %p78 = por %p76, %p77
      %p79 = scmp.ne.s32.totalorder %s67, %s68
      %p80 = scmp.eq.s32.totalorder %s16, 2
      %p81 = por %p79, %p80
      %p83 = scmp.ne.s32.totalorder %s68, %s82
      %p84 = scmp.eq.s32.totalorder %s16, 0
      %p85 = por %p83, %p84
      %s86 = ssub.s32 %s10, %s17
      %p87 = scmp.eq.s32.totalorder %s86, 0
      %s89 = sadd.s32 %s88, 1
      %s90 = scalar_select %p87, %s88, %s89
      %p93 = pneg %p87
      %p94 = scmp.eq.s32.totalorder %s10, 2
      %p95 = por %p93, %p94
      %p96 = scmp.ne.s32.totalorder %s88, %s91
      %p97 = scmp.eq.s32.totalorder %s10, 0
      %p98 = por %p96, %p97
      %p99 = scmp.ne.s32.totalorder %s88, %s91
      %p100 = scmp.eq.s32.totalorder %s15, 2
      %p101 = por %p99, %p100
      %p102 = scmp.ne.s32.totalorder %s91, %s92
      %p103 = scmp.eq.s32.totalorder %s15, 0
      %p104 = por %p102, %p103
      %p105 = scmp.ne.s32.totalorder %s91, %s92
      %p106 = scmp.eq.s32.totalorder %s16, 2
      %p107 = por %p105, %p106
      %p109 = scmp.ne.s32.totalorder %s92, %s108
      %p110 = scmp.eq.s32.totalorder %s16, 0
      %p111 = por %p109, %p110
      %p112 = scmp.le.s32.totalorder 1, %s10
      %p113 = scmp.lt.s32.totalorder %s10, 4
      %p114 = pnand %p112, %p113
      %p115 = pneg %p114
      // Predicated region
      $region9: #{linear_classifier_forward.1} parent=5 // pred_check
        _
      $region10: #{linear_classifier_forward.1} parent=5 // pred_check_branch
        %117 = sbr.rel (%p114) target = $region12
      $region11: #{linear_classifier_forward.1} parent=5 // pred_region
        %s118 = ssub.s32 %s10, 1
        // Predicated region
        $region13: #{linear_classifier_forward.1} parent=11 // pred_check
          %p119 = pneg %p57
        $region14: #{linear_classifier_forward.1} parent=11 // pred_check_branch
          %121 = sbr.rel (%p119) target = $region16
        $region15: #{linear_classifier_forward.1} parent=11 // pred_region
          _
        $region16: #{linear_classifier_forward.1} parent=11 // pred_fallthru
          _
        // Predicated region
        $region17: #{linear_classifier_forward.1} parent=11 // pred_check
          %p122 = pneg %p78
        $region18: #{linear_classifier_forward.1} parent=11 // pred_check_branch
          %124 = sbr.rel (%p122) target = $region20
        $region19: #{linear_classifier_forward.1} parent=11 // pred_region
          _
        $region20: #{linear_classifier_forward.1} parent=11 // pred_fallthru
          _
      $region12: #{linear_classifier_forward.1} parent=5 // pred_fallthru
        _
      %p125 = scmp.lt.s32.totalorder %s10, 3
      // Predicated region
      $region21: #{linear_classifier_forward.1} parent=5 // pred_check
        %p126 = pneg %p125
      $region22: #{linear_classifier_forward.1} parent=5 // pred_check_branch
        %128 = sbr.rel (%p126) target = $region24
      $region23: #{linear_classifier_forward.1} parent=5 // pred_region
        // Predicated region
        $region25: #{linear_classifier_forward.1} parent=23 // pred_check
          %p129 = pneg %p30
        $region26: #{linear_classifier_forward.1} parent=23 // pred_check_branch
          %131 = sbr.rel (%p129) target = $region28
        $region27: #{linear_classifier_forward.1} parent=23 // pred_region
          %s132 = smul.u32 16, %s10
          %s133 = ssub.s32 38, %s132
          %p134 = scmp.lt.s32.totalorder %s133, 16
          %s135 = scalar_select %p134, %s133, 16
          %s136 = smul.u32 8, %s135
          %p137 = scmp.lt.s32.totalorder %s132, 37
          %s138 = scalar_select %p137, %s132, 37
          %s139 = smul.addr %s138, 8
          %s140 = scalar_lea.vmem %s0, %s139
          %s141 = smul.u32 16, %s10
          %s142 = ssub.s32 38, %s141
          %p143 = scmp.lt.s32.totalorder %s142, 16
          %s144 = scalar_select %p143, %s142, 16
          %s145 = smul.u32 8, %s144
        $region28: #{linear_classifier_forward.1} parent=23 // pred_fallthru
          _
      $region24: #{linear_classifier_forward.1} parent=5 // pred_fallthru
        _
      %p146 = scmp.le.s32.totalorder 1, %s10
      %p147 = scmp.lt.s32.totalorder %s10, 4
      %p148 = pnand %p146, %p147
      %p149 = pneg %p148
      // Predicated region
      $region29: #{linear_classifier_forward.1} parent=5 // pred_check
        _
      $region30: #{linear_classifier_forward.1} parent=5 // pred_check_branch
        %151 = sbr.rel (%p148) target = $region32
      $region31: #{linear_classifier_forward.1} parent=5 // pred_region
        %s152 = ssub.s32 %s10, 1
        %s153 = smul.u32 16, %s15
        %s154 = ssub.s32 38, %s153
        %p155 = scmp.lt.s32.totalorder %s154, 16
        %s156 = scalar_select %p155, %s154, 16
        %s157 = smul.u32 8, %s156
        %p158 = scmp.lt.s32.totalorder %s153, 37
        %s159 = scalar_select %p158, %s153, 37
        %s160 = smul.addr %s159, 8
        %s161 = scalar_lea.vmem %s0, %s160
        %p162 = pneg %p36
        %p163 = pneg %p33
        %p164 = pneg %p57
        %p165 = pneg %p54
        %p166 = pneg %p78
        %p167 = pneg %p75
        %p168 = pneg %p104
        %p169 = pneg %p101
        %s170 = sand.u32 %s91, 1
        %s171 = sand.u32 %s91, 1
        %s172 = smul.addr %s171, 128
        %s173 = scalar_lea.vmem [#allocation3], %s172
        %s174 = smul.u32 16, %s15
        %s175 = ssub.s32 38, %s174
        %p176 = scmp.lt.s32.totalorder %s175, 16
        %s177 = scalar_select %p176, %s175, 16
        %s178 = smul.u32 8, %s177
        %p179 = scmp.lt.s32.totalorder %s174, 37
        %s180 = scalar_select %p179, %s174, 37
        %s181 = smul.addr %s180, 8
        %s182 = scalar_lea.vmem %s0, %s181
        %s183 = smul.u32 16, %s15
        %s184 = ssub.s32 38, %s183
        %p185 = scmp.lt.s32.totalorder %s184, 16
        %s186 = scalar_select %p185, %s184, 16
        %s187 = smul.u32 8, %s186
        %s188 = smul.u32 16, %s15
        %s189 = ssub.s32 38, %s188
        %p190 = scmp.lt.s32.totalorder %s189, 16
        %s191 = scalar_select %p190, %s189, 16
        %s192 = smul.u32 8, %s191
        %v193 = vld [vmem:[%s182] sm:$0xff]
        %v194 = vld [vmem:[%s182 + $0x8] sm:$0xff]
        %v195 = vld [vmem:[%s182 + $0x10] sm:$0xff]
        %v196 = vld [vmem:[%s182 + $0x18] sm:$0xff]
        %v197 = vld [vmem:[%s182 + $0x20] sm:$0xff]
        %v198 = vld [vmem:[%s182 + $0x28] sm:$0xff]
        %v199 = vld [vmem:[%s182 + $0x30] sm:$0xff]
        %v200 = vld [vmem:[%s182 + $0x38] sm:$0xff]
        %v201 = vld [vmem:[%s182 + $0x40] sm:$0xff]
        %v202 = vld [vmem:[%s182 + $0x48] sm:$0xff]
        %v203 = vld [vmem:[%s182 + $0x50] sm:$0xff]
        %v204 = vld [vmem:[%s182 + $0x58] sm:$0xff]
        %v205 = vld [vmem:[%s182 + $0x60] sm:$0xff]
        %v206 = vld [vmem:[%s182 + $0x68] sm:$0xff]
        %v207 = vld [vmem:[%s182 + $0x70] sm:$0xff]
        %v208 = vld [vmem:[%s182 + $0x78] sm:$0xff]
        %v209 = vld [vmem:[%s1] sm:$0xff]
        %v210 = vld [vmem:[%s1 + $0x8] sm:$0xff]
        %v211 = vld [vmem:[%s1 + $0x10] sm:$0xff]
        %v212 = vld [vmem:[%s1 + $0x18] sm:$0xff]
        %s213 = sld [smem:[#allocation2]]
        %v214 = vstv %s213
        %vm215 = vcmask 261120
        %v217 = vsel %vm215, %v193, 0
        %v220 = vsel %vm215, %v194, 0
        %v223 = vsel %vm215, %v195, 0
        %v226 = vsel %vm215, %v196, 0
        %v229 = vsel %vm215, %v197, 0
        %v232 = vsel %vm215, %v198, 0
        %v235 = vsel %vm215, %v199, 0
        %v238 = vsel %vm215, %v200, 0
        %v241 = vsel %vm215, %v201, 0
        %v244 = vsel %vm215, %v202, 0
        %v247 = vsel %vm215, %v203, 0
        %v250 = vsel %vm215, %v204, 0
        %v253 = vsel %vm215, %v205, 0
        %v256 = vsel %vm215, %v206, 0
        %v259 = vsel %vm215, %v207, 0
        %v262 = vsel %vm215, %v208, 0
        %264 = vmatpush.msra.mxu0 0.0
        %265 = vmatpush.msra.mxu0 0.0
        %266 = vmatpush.msra.mxu0 0.0
        %267 = vmatpush.msra.mxu0 0.0
        %268 = vmatpush.msra.mxu0 0.0
        %269 = vmatpush.msra.mxu0 0.0
        %270 = vmatpush.msra.mxu0 0.0
        %271 = vmatpush.msra.mxu0 0.0
        %272 = vmatpush.msra.mxu0 0.0
        %273 = vmatpush.msra.mxu0 0.0
        %274 = vmatpush.msra.mxu0 0.0
        %275 = vmatpush.msra.mxu0 0.0
        %276 = vmatpush.msra.mxu0 %v212
        %277 = vmatpush.msra.mxu0 %v211
        %278 = vmatpush.msra.mxu0 %v210
        %279 = vmatpush.msra.mxu0 %v209
        %280 = vmatmul.f32.gmra.mxu0 %v217
        %v281 = vpop.f32.mrf.mxu0
        %v282 = vadd.f32 %v214, %v281
        %283 = vmatmul.f32.gmra.mxu0 %v220
        %v284 = vpop.f32.mrf.mxu0
        %v285 = vadd.f32 %v214, %v284
        %286 = vmatmul.f32.gmra.mxu0 %v223
        %v287 = vpop.f32.mrf.mxu0
        %v288 = vadd.f32 %v214, %v287
        %289 = vmatmul.f32.gmra.mxu0 %v226
        %v290 = vpop.f32.mrf.mxu0
        %v291 = vadd.f32 %v214, %v290
        %292 = vmatmul.f32.gmra.mxu0 %v229
        %v293 = vpop.f32.mrf.mxu0
        %v294 = vadd.f32 %v214, %v293
        %295 = vmatmul.f32.gmra.mxu0 %v232
        %v296 = vpop.f32.mrf.mxu0
        %v297 = vadd.f32 %v214, %v296
        %298 = vmatmul.f32.gmra.mxu0 %v235
        %v299 = vpop.f32.mrf.mxu0
        %v300 = vadd.f32 %v214, %v299
        %301 = vmatmul.f32.gmra.mxu0 %v238
        %v302 = vpop.f32.mrf.mxu0
        %v303 = vadd.f32 %v214, %v302
        %304 = vmatmul.f32.gmra.mxu0 %v241
        %v305 = vpop.f32.mrf.mxu0
        %v306 = vadd.f32 %v214, %v305
        %307 = vmatmul.f32.gmra.mxu0 %v244
        %v308 = vpop.f32.mrf.mxu0
        %v309 = vadd.f32 %v214, %v308
        %310 = vmatmul.f32.gmra.mxu0 %v247
        %v311 = vpop.f32.mrf.mxu0
        %v312 = vadd.f32 %v214, %v311
        %313 = vmatmul.f32.gmra.mxu0 %v250
        %v314 = vpop.f32.mrf.mxu0
        %v315 = vadd.f32 %v214, %v314
        %316 = vmatmul.f32.gmra.mxu0 %v253
        %v317 = vpop.f32.mrf.mxu0
        %v318 = vadd.f32 %v214, %v317
        %319 = vmatmul.f32.gmra.mxu0 %v256
        %v320 = vpop.f32.mrf.mxu0
        %v321 = vadd.f32 %v214, %v320
        %322 = vmatmul.f32.gmra.mxu0 %v259
        %v323 = vpop.f32.mrf.mxu0
        %v324 = vadd.f32 %v214, %v323
        %325 = vmatmul.f32.gmra.mxu0 %v262
        %v326 = vpop.f32.mrf.mxu0
        %v327 = vadd.f32 %v214, %v326
        %328 = vdwg.mxu0
        %vm329 = vcmask 7168
        %330 = vst.msk [vmem:[%s173] sm:$0xff] %vm329, %v282
        %331 = vst.msk [vmem:[%s173 + $0x8] sm:$0xff] %vm329, %v285
        %332 = vst.msk [vmem:[%s173 + $0x10] sm:$0xff] %vm329, %v288
        %333 = vst.msk [vmem:[%s173 + $0x18] sm:$0xff] %vm329, %v291
        %334 = vst.msk [vmem:[%s173 + $0x20] sm:$0xff] %vm329, %v294
        %335 = vst.msk [vmem:[%s173 + $0x28] sm:$0xff] %vm329, %v297
        %336 = vst.msk [vmem:[%s173 + $0x30] sm:$0xff] %vm329, %v300
        %337 = vst.msk [vmem:[%s173 + $0x38] sm:$0xff] %vm329, %v303
        %338 = vst.msk [vmem:[%s173 + $0x40] sm:$0xff] %vm329, %v306
        %339 = vst.msk [vmem:[%s173 + $0x48] sm:$0xff] %vm329, %v309
        %340 = vst.msk [vmem:[%s173 + $0x50] sm:$0xff] %vm329, %v312
        %341 = vst.msk [vmem:[%s173 + $0x58] sm:$0xff] %vm329, %v315
        %342 = vst.msk [vmem:[%s173 + $0x60] sm:$0xff] %vm329, %v318
        %343 = vst.msk [vmem:[%s173 + $0x68] sm:$0xff] %vm329, %v321
        %344 = vst.msk [vmem:[%s173 + $0x70] sm:$0xff] %vm329, %v324
        %345 = vst.msk [vmem:[%s173 + $0x78] sm:$0xff] %vm329, %v327
        %s346 = sand.u32 %s91, 1
        %s347 = sand.u32 %s91, 1
        %s348 = smul.addr %s347, 128
        %s349 = scalar_lea.vmem [#allocation3], %s348
        // Predicated region
        $region33: #{linear_classifier_forward.1} parent=31 // pred_check
          %p350 = pneg %p101
        $region34: #{linear_classifier_forward.1} parent=31 // pred_check_branch
          %352 = sbr.rel (%p350) target = $region36
        $region35: #{linear_classifier_forward.1} parent=31 // pred_region
          %s353 = smul.u32 16, %s15
          %s354 = ssub.s32 38, %s353
          %p355 = scmp.lt.s32.totalorder %s354, 16
          %s356 = scalar_select %p355, %s354, 16
          %s357 = smul.u32 8, %s356
          %p358 = scmp.ne.s32.totalorder 0, %s357
          %s359 = smul.addr %s353, 8
          %s360 = scalar_lea.vmem %s3, %s359
          // Predicated region
          $region37: #{linear_classifier_forward.1} parent=35 // pred_check
            %p361 = pneg %p358
          $region38: #{linear_classifier_forward.1} parent=35 // pred_check_branch
            %363 = sbr.rel (%p361) target = $region40
          $region39: #{linear_classifier_forward.1} parent=35 // pred_region
            // Predicated region
            $region41: #{linear_classifier_forward.1} parent=39 // pred_check
              _
            $region42: #{linear_classifier_forward.1} parent=39 // pred_check_branch
              %365 = sbr.rel (0) target = $region44
            $region43: #{linear_classifier_forward.1} parent=39 // pred_region
              // Predicated region
              $region63: #{linear_classifier_forward.1} parent=43 // pred_check
                _
              $region64: #{linear_classifier_forward.1} parent=43 // pred_check_branch
                %445 = sbr.rel (0) target = $region66
              $region65: #{linear_classifier_forward.1} parent=43 // pred_region
                %s446 = sshrl.u32 %s356, 4
                // While loop
                $region67: #{linear_classifier_forward.1} parent=65 // loop_pre_header
                  _
                $region68: #{linear_classifier_forward.1} parent=65 // loop_header
                  %s448 = sphi 0, %s450
                  %p449 = scmp.ge.s32.totalorder %s448, %s446
                  %s453 = sphi 0, %s490
                  %s454 = sphi %s349, %s493
                  %s455 = sphi %s360, %s494
                $region69: #{linear_classifier_forward.1} parent=65 // loop_header_branch
                  %452 = sbr.rel (%p449) target = $region73
                $region70: #{linear_classifier_forward.1} parent=65 // loop_body
                  %v456 = vld [vmem:[%s454] sm:$0xff]
                  %457 = vst [vmem:[%s455] sm:$0xff] %v456
                  %v458 = vld [vmem:[%s454 + $0x8] sm:$0xff]
                  %459 = vst [vmem:[%s455 + $0x8] sm:$0xff] %v458
                  %v460 = vld [vmem:[%s454 + $0x10] sm:$0xff]
                  %461 = vst [vmem:[%s455 + $0x10] sm:$0xff] %v460
                  %v462 = vld [vmem:[%s454 + $0x18] sm:$0xff]
                  %463 = vst [vmem:[%s455 + $0x18] sm:$0xff] %v462
                  %v464 = vld [vmem:[%s454 + $0x20] sm:$0xff]
                  %465 = vst [vmem:[%s455 + $0x20] sm:$0xff] %v464
                  %v466 = vld [vmem:[%s454 + $0x28] sm:$0xff]
                  %467 = vst [vmem:[%s455 + $0x28] sm:$0xff] %v466
                  %v468 = vld [vmem:[%s454 + $0x30] sm:$0xff]
                  %469 = vst [vmem:[%s455 + $0x30] sm:$0xff] %v468
                  %v470 = vld [vmem:[%s454 + $0x38] sm:$0xff]
                  %471 = vst [vmem:[%s455 + $0x38] sm:$0xff] %v470
                  %v472 = vld [vmem:[%s454 + $0x40] sm:$0xff]
                  %473 = vst [vmem:[%s455 + $0x40] sm:$0xff] %v472
                  %v474 = vld [vmem:[%s454 + $0x48] sm:$0xff]
                  %475 = vst [vmem:[%s455 + $0x48] sm:$0xff] %v474
                  %v476 = vld [vmem:[%s454 + $0x50] sm:$0xff]
                  %477 = vst [vmem:[%s455 + $0x50] sm:$0xff] %v476
                  %v478 = vld [vmem:[%s454 + $0x58] sm:$0xff]
                  %479 = vst [vmem:[%s455 + $0x58] sm:$0xff] %v478
                  %v480 = vld [vmem:[%s454 + $0x60] sm:$0xff]
                  %481 = vst [vmem:[%s455 + $0x60] sm:$0xff] %v480
                  %v482 = vld [vmem:[%s454 + $0x68] sm:$0xff]
                  %483 = vst [vmem:[%s455 + $0x68] sm:$0xff] %v482
                  %v484 = vld [vmem:[%s454 + $0x70] sm:$0xff]
                  %485 = vst [vmem:[%s455 + $0x70] sm:$0xff] %v484
                  %v486 = vld [vmem:[%s454 + $0x78] sm:$0xff]
                  %487 = vst [vmem:[%s455 + $0x78] sm:$0xff] %v486
                  %s488 = sadd.s32 1, %s453
                  %p489 = scmp.ge.s32.totalorder %s488, %s446
                  %s490 = scalar_select %p489, 0, %s488
                  %s491 = smul.u32 %s490, 128
                  %s492 = smul.u32 %s490, 128
                  %s493 = scalar_lea.vmem %s349, %s491 [#allocation3]
                  %s494 = scalar_lea.vmem %s360, %s492
                $region71: #{linear_classifier_forward.1} parent=65 // loop_footer
                  %s450 = sadd.s32 %s448, 1
                $region72: #{linear_classifier_forward.1} parent=65 // loop_footer_branch
                  %447 = sbr.rel target = $region68
                $region73: #{linear_classifier_forward.1} parent=65 // loop_exit
                  _
                %s495 = sshrl.u32 %s356, 4
                %s496 = sand.u32 %s356, 15
                %s497 = smul.u32 %s495, 16
                %s498 = smul.u32 8, %s497
                %s499 = scalar_lea.vmem %s349, %s498 [#allocation3]
                %s500 = smul.u32 8, %s497
                %s501 = scalar_lea.vmem %s360, %s500
                // While loop
                $region74: #{linear_classifier_forward.1} parent=65 // loop_pre_header
                  _
                $region75: #{linear_classifier_forward.1} parent=65 // loop_header
                  %s503 = sphi 0, %s505
                  %p504 = scmp.ge.s32.totalorder %s503, %s496
                  %s508 = sphi 0, %s515
                  %s509 = sphi %s499, %s518
                  %s510 = sphi %s501, %s519
                $region76: #{linear_classifier_forward.1} parent=65 // loop_header_branch
                  %507 = sbr.rel (%p504) target = $region80
                $region77: #{linear_classifier_forward.1} parent=65 // loop_body
                  %v511 = vld [vmem:[%s509] sm:$0xff]
                  %512 = vst [vmem:[%s510] sm:$0xff] %v511
                  %s513 = sadd.s32 1, %s508
                  %p514 = scmp.ge.s32.totalorder %s513, %s496
                  %s515 = scalar_select %p514, 0, %s513
                  %s516 = smul.u32 %s515, 8
                  %s517 = smul.u32 %s515, 8
                  %s518 = scalar_lea.vmem %s499, %s516 [#allocation3]
                  %s519 = scalar_lea.vmem %s501, %s517
                $region78: #{linear_classifier_forward.1} parent=65 // loop_footer
                  %s505 = sadd.s32 %s503, 1
                $region79: #{linear_classifier_forward.1} parent=65 // loop_footer_branch
                  %502 = sbr.rel target = $region75
                $region80: #{linear_classifier_forward.1} parent=65 // loop_exit
                  _
              $region66: #{linear_classifier_forward.1} parent=43 // pred_fallthru
                _
              // Predicated region
              $region81: #{linear_classifier_forward.1} parent=43 // pred_check
                _
              $region82: #{linear_classifier_forward.1} parent=43 // pred_check_branch
                %521 = sbr.rel target = $region84
              $region83: #{linear_classifier_forward.1} parent=43 // pred_region
                _
              $region84: #{linear_classifier_forward.1} parent=43 // pred_fallthru
                _
            $region44: #{linear_classifier_forward.1} parent=39 // pred_fallthru
              _
            // Predicated region
            $region45: #{linear_classifier_forward.1} parent=39 // pred_check
              _
            $region46: #{linear_classifier_forward.1} parent=39 // pred_check_branch
              %367 = sbr.rel target = $region48
            $region47: #{linear_classifier_forward.1} parent=39 // pred_region
              %s369 = ssub.s32 256, 1
              %s370 = sshrl.u32 %s356, 4
              // While loop
              $region49: #{linear_classifier_forward.1} parent=47 // loop_pre_header
                _
              $region50: #{linear_classifier_forward.1} parent=47 // loop_header
                %s372 = sphi 0, %s374
                %p373 = scmp.ge.s32.totalorder %s372, %s370
                %s377 = sphi 0, %s414
                %s378 = sphi %s349, %s417
                %s379 = sphi %s360, %s418
              $region51: #{linear_classifier_forward.1} parent=47 // loop_header_branch
                %376 = sbr.rel (%p373) target = $region55
              $region52: #{linear_classifier_forward.1} parent=47 // loop_body
                %v380 = vld [vmem:[%s378] sm:%s369]
                %381 = vst [vmem:[%s379] sm:%s369] %v380
                %v382 = vld [vmem:[%s378 + $0x8] sm:%s369]
                %383 = vst [vmem:[%s379 + $0x8] sm:%s369] %v382
                %v384 = vld [vmem:[%s378 + $0x10] sm:%s369]
                %385 = vst [vmem:[%s379 + $0x10] sm:%s369] %v384
                %v386 = vld [vmem:[%s378 + $0x18] sm:%s369]
                %387 = vst [vmem:[%s379 + $0x18] sm:%s369] %v386
                %v388 = vld [vmem:[%s378 + $0x20] sm:%s369]
                %389 = vst [vmem:[%s379 + $0x20] sm:%s369] %v388
                %v390 = vld [vmem:[%s378 + $0x28] sm:%s369]
                %391 = vst [vmem:[%s379 + $0x28] sm:%s369] %v390
                %v392 = vld [vmem:[%s378 + $0x30] sm:%s369]
                %393 = vst [vmem:[%s379 + $0x30] sm:%s369] %v392
                %v394 = vld [vmem:[%s378 + $0x38] sm:%s369]
                %395 = vst [vmem:[%s379 + $0x38] sm:%s369] %v394
                %v396 = vld [vmem:[%s378 + $0x40] sm:%s369]
                %397 = vst [vmem:[%s379 + $0x40] sm:%s369] %v396
                %v398 = vld [vmem:[%s378 + $0x48] sm:%s369]
                %399 = vst [vmem:[%s379 + $0x48] sm:%s369] %v398
                %v400 = vld [vmem:[%s378 + $0x50] sm:%s369]
                %401 = vst [vmem:[%s379 + $0x50] sm:%s369] %v400
                %v402 = vld [vmem:[%s378 + $0x58] sm:%s369]
                %403 = vst [vmem:[%s379 + $0x58] sm:%s369] %v402
                %v404 = vld [vmem:[%s378 + $0x60] sm:%s369]
                %405 = vst [vmem:[%s379 + $0x60] sm:%s369] %v404
                %v406 = vld [vmem:[%s378 + $0x68] sm:%s369]
                %407 = vst [vmem:[%s379 + $0x68] sm:%s369] %v406
                %v408 = vld [vmem:[%s378 + $0x70] sm:%s369]
                %409 = vst [vmem:[%s379 + $0x70] sm:%s369] %v408
                %v410 = vld [vmem:[%s378 + $0x78] sm:%s369]
                %411 = vst [vmem:[%s379 + $0x78] sm:%s369] %v410
                %s412 = sadd.s32 1, %s377
                %p413 = scmp.ge.s32.totalorder %s412, %s370
                %s414 = scalar_select %p413, 0, %s412
                %s415 = smul.u32 %s414, 128
                %s416 = smul.u32 %s414, 128
                %s417 = scalar_lea.vmem %s349, %s415 [#allocation3]
                %s418 = scalar_lea.vmem %s360, %s416
              $region53: #{linear_classifier_forward.1} parent=47 // loop_footer
                %s374 = sadd.s32 %s372, 1
              $region54: #{linear_classifier_forward.1} parent=47 // loop_footer_branch
                %371 = sbr.rel target = $region50
              $region55: #{linear_classifier_forward.1} parent=47 // loop_exit
                _
              %s419 = sshrl.u32 %s356, 4
              %s420 = sand.u32 %s356, 15
              %s421 = smul.u32 %s419, 16
              %s422 = smul.u32 8, %s421
              %s423 = scalar_lea.vmem %s349, %s422 [#allocation3]
              %s424 = smul.u32 8, %s421
              %s425 = scalar_lea.vmem %s360, %s424
              // While loop
              $region56: #{linear_classifier_forward.1} parent=47 // loop_pre_header
                _
              $region57: #{linear_classifier_forward.1} parent=47 // loop_header
                %s427 = sphi 0, %s429
                %p428 = scmp.ge.s32.totalorder %s427, %s420
                %s432 = sphi 0, %s439
                %s433 = sphi %s423, %s442
                %s434 = sphi %s425, %s443
              $region58: #{linear_classifier_forward.1} parent=47 // loop_header_branch
                %431 = sbr.rel (%p428) target = $region62
              $region59: #{linear_classifier_forward.1} parent=47 // loop_body
                %v435 = vld [vmem:[%s433] sm:%s369]
                %436 = vst [vmem:[%s434] sm:%s369] %v435
                %s437 = sadd.s32 1, %s432
                %p438 = scmp.ge.s32.totalorder %s437, %s420
                %s439 = scalar_select %p438, 0, %s437
                %s440 = smul.u32 %s439, 8
                %s441 = smul.u32 %s439, 8
                %s442 = scalar_lea.vmem %s423, %s440 [#allocation3]
                %s443 = scalar_lea.vmem %s425, %s441
              $region60: #{linear_classifier_forward.1} parent=47 // loop_footer
                %s429 = sadd.s32 %s427, 1
              $region61: #{linear_classifier_forward.1} parent=47 // loop_footer_branch
                %426 = sbr.rel target = $region57
              $region62: #{linear_classifier_forward.1} parent=47 // loop_exit
                _
            $region48: #{linear_classifier_forward.1} parent=39 // pred_fallthru
              _
          $region40: #{linear_classifier_forward.1} parent=35 // pred_fallthru
            _
          %522 = vnop
        $region36: #{linear_classifier_forward.1} parent=31 // pred_fallthru
          _
      $region32: #{linear_classifier_forward.1} parent=5 // pred_fallthru
        _
      %p523 = scmp.le.s32.totalorder 2, %s10
      // Predicated region
      $region85: #{linear_classifier_forward.1} parent=5 // pred_check
        %p524 = pneg %p523
      $region86: #{linear_classifier_forward.1} parent=5 // pred_check_branch
        %526 = sbr.rel (%p524) target = $region88
      $region87: #{linear_classifier_forward.1} parent=5 // pred_region
        %s527 = ssub.s32 %s10, 2
        // Predicated region
        $region89: #{linear_classifier_forward.1} parent=87 // pred_check
          %p528 = pneg %p107
        $region90: #{linear_classifier_forward.1} parent=87 // pred_check_branch
          %530 = sbr.rel (%p528) target = $region92
        $region91: #{linear_classifier_forward.1} parent=87 // pred_region
          %s531 = sand.u32 %s92, 1
          %s532 = sand.u32 %s92, 1
          %s533 = smul.addr %s532, 128
          %s534 = scalar_lea.vmem [#allocation3], %s533
        $region92: #{linear_classifier_forward.1} parent=87 // pred_fallthru
          _
      $region88: #{linear_classifier_forward.1} parent=5 // pred_fallthru
        _
    $region6: #{linear_classifier_forward.1} parent=1 // loop_footer
      %s14 = sadd.s32 1, %s10
    $region7: #{linear_classifier_forward.1} parent=1 // loop_footer_branch
      %9 = sbr.rel target = $region3
    $region8: #{linear_classifier_forward.1} parent=1 // loop_exit
      _

</llo_original>
